<compile_context>
chip_gen: v5e
topology: v5e:2x2
jax: 0.10.0
libtpu: 0.0.40
codegen_flags: <defaults>
</compile_context>

<pallas_src>
import functools

import jax
import jax.numpy as jnp
from jax.experimental import pallas as pl
from jax.experimental.pallas import tpu as pltpu

W1 = 0.82
W2 = 0.18
EPS = 1e-07

LANES = 128      # vreg lane width
MAX_TM = 2048    # max rows per grid step (2048*128*4B = 1 MiB per f32 block)


def _wbce_kernel(yp_ref, yt_ref, out_ref, acc_ref, *, total_n, tm, steps_per_core):
    c = pl.program_id(0)   # core split ("parallel")
    i = pl.program_id(1)   # row-tile within this core's range ("arbitrary")

    @pl.when(i == 0)
    def _():
        acc_ref[...] = jnp.zeros_like(acc_ref)

    yp = yp_ref[...].astype(jnp.float32)
    yt = yt_ref[...].astype(jnp.float32)

    yp = jnp.clip(yp, EPS, 1.0 - EPS)
    loss = (-W1) * yt * jnp.log(yp) + (-W2) * (1.0 - yt) * jnp.log(1.0 - yp)

    block_elems = tm * LANES
    block_start = (c * steps_per_core + i) * block_elems   # flat element offset
    needs_mask = (block_start + block_elems) > total_n

    # Fast path: tile fully inside the valid data -> no iota/compare/select.
    @pl.when(jnp.logical_not(needs_mask))
    def _():
        acc_ref[...] += loss.reshape(tm // 8, 8, LANES).sum(axis=0)

    # Slow path: tile contains (or is entirely) padding -> mask it out.
    @pl.when(needs_mask)
    def _():
        rows = jax.lax.broadcasted_iota(jnp.int32, (tm, LANES), 0)
        cols = jax.lax.broadcasted_iota(jnp.int32, (tm, LANES), 1)
        flat_idx = block_start + rows * LANES + cols
        masked = jnp.where(flat_idx < total_n, loss, 0.0)
        acc_ref[...] += masked.reshape(tm // 8, 8, LANES).sum(axis=0)

    # Single XLU reduce per core, on the last step only.
    @pl.when(i == pl.num_programs(1) - 1)
    def _():
        out_ref[...] = jnp.sum(acc_ref[...], keepdims=True)


def weighted_bce(y_pred, y_true):
    """Mean weighted BCE over all elements (matches the PyTorch module)."""
    assert y_pred.shape == y_true.shape
    total_n = int(y_pred.size)
    assert 0 < total_n < 2**31, "int32 flat indexing assumed"

    # Flatten in native dtype (no astype pass); kernel upcasts to f32.
    yp = jnp.ravel(y_pred)
    yt = jnp.ravel(y_true)

    # Tiling: rows of 128 lanes, row count rounded up to a multiple of 8.
    n_rows = pl.cdiv(total_n, LANES)
    n_rows8 = pl.cdiv(n_rows, 8) * 8

    steps_total = pl.cdiv(n_rows8, MAX_TM)          # number of row tiles needed
    n_split = 2 if steps_total >= 2 else 1          # 2-core split when enough work
    steps_per_core = pl.cdiv(steps_total, n_split)
    total_tiles = n_split * steps_per_core
    tm = pl.cdiv(pl.cdiv(n_rows8, total_tiles), 8) * 8   # rows per tile (<= MAX_TM)

    n_rows_padded = total_tiles * tm
    padded_len = n_rows_padded * LANES
    assert padded_len < 2**31
    pad = padded_len - total_n
    if pad:
        # Padded entries are masked inside the kernel; pad values only need to
        # produce finite loss values.
        yp = jnp.pad(yp, (0, pad), constant_values=0.5)
        yt = jnp.pad(yt, (0, pad), constant_values=0.0)

    yp2d = yp.reshape(n_rows_padded, LANES)
    yt2d = yt.reshape(n_rows_padded, LANES)

    kernel = functools.partial(
        _wbce_kernel, total_n=total_n, tm=tm, steps_per_core=steps_per_core
    )
    in_idx = lambda c, i: (c * steps_per_core + i, 0)

    partial_sums = pl.pallas_call(
        kernel,
        out_shape=jax.ShapeDtypeStruct((n_split, 1), jnp.float32),
        grid=(n_split, steps_per_core),
        in_specs=[
            pl.BlockSpec((tm, LANES), in_idx),
            pl.BlockSpec((tm, LANES), in_idx),
        ],
        out_specs=pl.BlockSpec((1, 1), lambda c, i: (c, 0)),
        scratch_shapes=[pltpu.VMEM((8, LANES), jnp.float32)],
        compiler_params=pltpu.CompilerParams(
            dimension_semantics=("parallel", "arbitrary"),
        ),
    )(yp2d, yt2d)

    return jnp.sum(partial_sums) / jnp.float32(total_n)


def weighted_bce_ref(y_pred, y_true):
    yp = jnp.clip(y_pred.astype(jnp.float32), EPS, 1.0 - EPS)
    yt = y_true.astype(jnp.float32)
    loss = -W1 * yt * jnp.log(yp) - W2 * (1.0 - yt) * jnp.log(1.0 - yp)
    return jnp.mean(loss)


if __name__ == "__main__":
    key = jax.random.PRNGKey(0)

    # Primary test: small NCHW-like prediction/label tensors.
    k1, k2 = jax.random.split(key)
    shape = (2, 4, 16, 16)
    y_pred = jax.nn.sigmoid(jax.random.normal(k1, shape, dtype=jnp.float32))
    y_true = (jax.random.uniform(k2, shape) > 0.5).astype(jnp.float32)

    out = jax.block_until_ready(weighted_bce(y_pred, y_true))
    ref = weighted_bce_ref(y_pred, y_true)
    assert jnp.allclose(out, ref, rtol=1e-5, atol=1e-6), (out, ref)

    # Extra check: non-lane-aligned shape (exercises the masked/padded path).
    k3, k4 = jax.random.split(k1)
    shape2 = (3, 5, 17, 19)
    yp2 = jax.nn.sigmoid(jax.random.normal(k3, shape2, dtype=jnp.float32))
    yt2 = (jax.random.uniform(k4, shape2) > 0.5).astype(jnp.float32)
    out2 = jax.block_until_ready(weighted_bce(yp2, yt2))
    ref2 = weighted_bce_ref(yp2, yt2)
    assert jnp.allclose(out2, ref2, rtol=1e-4, atol=1e-6), (out2, ref2)

    # Extra check: multi-tile / 2-way-split path.
    k5, k6 = jax.random.split(k3)
    shape3 = (2, 8, 128, 144)
    yp3 = jax.nn.sigmoid(jax.random.normal(k5, shape3, dtype=jnp.float32))
    yt3 = (jax.random.uniform(k6, shape3) > 0.5).astype(jnp.float32)
    out3 = jax.block_until_ready(weighted_bce(yp3, yt3))
    ref3 = weighted_bce_ref(yp3, yt3)
    assert jnp.allclose(out3, ref3, rtol=1e-4, atol=1e-6), (out3, ref3)

    print("KERNEL_OK")
</pallas_src>

<mosaic_0001>
module attributes {stable_mosaic.version = 11 : i64} {
  func.func @_wbce_kernel(%arg0: i32, %arg1: i32, %arg2: memref<16x128xf32, #tpu.memory_space<vmem>>, %arg3: memref<16x128xf32, #tpu.memory_space<vmem>>, %arg4: memref<1x1xf32, #tpu.memory_space<vmem>>, %arg5: memref<8x128xf32, #tpu.memory_space<vmem>>) attributes {dimension_semantics = [#tpu.dimension_semantics<parallel>, #tpu.dimension_semantics<arbitrary>], iteration_bounds = array<i64: 1, 1>, scalar_prefetch = 0 : i64, scratch_operands = 1 : i64, tpu.core_type = #tpu.core_type<tc>, window_params = [{transform_indices = @transform_0, window_bounds = array<i64: 16, 128>}, {transform_indices = @transform_1, window_bounds = array<i64: 16, 128>}, {transform_indices = @transform_2, window_bounds = array<i64: 1, 1>}]} {
    %c0_i32 = arith.constant 0 : i32
    %0 = arith.cmpi eq, %arg1, %c0_i32 : i32
    %1 = arith.extui %0 : i1 to i32
    %c0_i32_0 = arith.constant 0 : i32
    %2 = arith.cmpi ne, %1, %c0_i32_0 : i32
    scf.if %2 {
      %cst_15 = arith.constant 0.000000e+00 : f32
      %35 = vector.broadcast %cst_15 : f32 to vector<8x128xf32>
      %c0_16 = arith.constant 0 : index
      %c0_17 = arith.constant 0 : index
      %36 = vector.load %arg5[%c0_16, %c0_17] : memref<8x128xf32, #tpu.memory_space<vmem>>, vector<8x128xf32>
      tpu.vector_store %arg5[%c0_16, %c0_17], %35 {strides = array<i32>} : memref<8x128xf32, #tpu.memory_space<vmem>>, vector<8x128xf32>,
    } else {
    }
    %c0 = arith.constant 0 : index
    %c0_1 = arith.constant 0 : index
    %3 = vector.load %arg2[%c0, %c0_1] : memref<16x128xf32, #tpu.memory_space<vmem>>, vector<16x128xf32>
    %c0_2 = arith.constant 0 : index
    %c0_3 = arith.constant 0 : index
    %4 = vector.load %arg3[%c0_2, %c0_3] : memref<16x128xf32, #tpu.memory_space<vmem>>, vector<16x128xf32>
    %cst = arith.constant 1.000000e-07 : f32
    %cst_4 = arith.constant 0.99999988 : f32
    %5 = vector.broadcast %cst : f32 to vector<16x128xf32>
    %6 = arith.maximumf %5, %3 : vector<16x128xf32>
    %7 = vector.broadcast %cst_4 : f32 to vector<16x128xf32>
    %8 = arith.minimumf %7, %6 : vector<16x128xf32>
    %cst_5 = arith.constant -0.819999992 : f32
    %9 = vector.broadcast %cst_5 : f32 to vector<16x128xf32>
    %10 = arith.mulf %9, %4 : vector<16x128xf32>
    %11 = math.log %8 : vector<16x128xf32>
    %12 = arith.mulf %10, %11 : vector<16x128xf32>
    %cst_6 = arith.constant 1.000000e+00 : f32
    %13 = vector.broadcast %cst_6 : f32 to vector<16x128xf32>
    %14 = arith.subf %13, %4 : vector<16x128xf32>
    %cst_7 = arith.constant -1.800000e-01 : f32
    %15 = vector.broadcast %cst_7 : f32 to vector<16x128xf32>
    %16 = arith.mulf %15, %14 : vector<16x128xf32>
    %cst_8 = arith.constant 1.000000e+00 : f32
    %17 = vector.broadcast %cst_8 : f32 to vector<16x128xf32>
    %18 = arith.subf %17, %8 : vector<16x128xf32>
    %19 = math.log %18 : vector<16x128xf32>
    %20 = arith.mulf %16, %19 : vector<16x128xf32>
    %21 = arith.addf %12, %20 : vector<16x128xf32>
    %c1_i32 = arith.constant 1 : i32
    %22 = arith.muli %arg0, %c1_i32 : i32
    %23 = arith.addi %22, %arg1 : i32
    %c2048_i32 = arith.constant 2048 : i32
    %24 = arith.muli %23, %c2048_i32 : i32
    %c2048_i32_9 = arith.constant 2048 : i32
    %25 = arith.addi %24, %c2048_i32_9 : i32
    %c2048_i32_10 = arith.constant 2048 : i32
    %26 = arith.cmpi sgt, %25, %c2048_i32_10 : i32
    %true = arith.constant true
    %27 = arith.xori %26, %true : i1
    %28 = arith.extui %27 : i1 to i32
    %c0_i32_11 = arith.constant 0 : i32
    %29 = arith.cmpi ne, %28, %c0_i32_11 : i32
    scf.if %29 {
      %c0_15 = arith.constant 0 : index
      %c0_16 = arith.constant 0 : index
      %35 = vector.load %arg5[%c0_15, %c0_16] : memref<8x128xf32, #tpu.memory_space<vmem>>, vector<8x128xf32>
      %36 = vector.shape_cast %21 : vector<16x128xf32> to vector<2x8x128xf32>
      %cst_17 = arith.constant dense<0.000000e+00> : vector<8x128xf32>
      %37 = vector.multi_reduction <add>, %36, %cst_17 [0] : vector<2x8x128xf32> to vector<8x128xf32>
      %38 = arith.addf %35, %37 : vector<8x128xf32>
      %c0_18 = arith.constant 0 : index
      %c0_19 = arith.constant 0 : index
      %39 = vector.load %arg5[%c0_18, %c0_19] : memref<8x128xf32, #tpu.memory_space<vmem>>, vector<8x128xf32>
      tpu.vector_store %arg5[%c0_18, %c0_19], %38 {strides = array<i32>} : memref<8x128xf32, #tpu.memory_space<vmem>>, vector<8x128xf32>,
    } else {
    }
    %30 = arith.extui %26 : i1 to i32
    %c0_i32_12 = arith.constant 0 : i32
    %31 = arith.cmpi ne, %30, %c0_i32_12 : i32
    scf.if %31 {
      %35 = tpu.iota {dimensions = array<i32: 0>} : vector<16x128xi32>
      %36 = tpu.iota {dimensions = array<i32: 1>} : vector<16x128xi32>
      %c128_i32 = arith.constant 128 : i32
      %37 = vector.broadcast %c128_i32 : i32 to vector<16x128xi32>
      %38 = arith.muli %35, %37 : vector<16x128xi32>
      %39 = vector.broadcast %24 : i32 to vector<16x128xi32>
      %40 = arith.addi %39, %38 : vector<16x128xi32>
      %41 = arith.addi %40, %36 : vector<16x128xi32>
      %c2048_i32_15 = arith.constant 2048 : i32
      %42 = vector.broadcast %c2048_i32_15 : i32 to vector<16x128xi32>
      %43 = arith.cmpi slt, %41, %42 : vector<16x128xi32>
      %cst_16 = arith.constant 0.000000e+00 : f32
      %44 = vector.broadcast %cst_16 : f32 to vector<16x128xf32>
      %45 = arith.select %43, %21, %44 : vector<16x128xi1>, vector<16x128xf32>
      %c0_17 = arith.constant 0 : index
      %c0_18 = arith.constant 0 : index
      %46 = vector.load %arg5[%c0_17, %c0_18] : memref<8x128xf32, #tpu.memory_space<vmem>>, vector<8x128xf32>
      %47 = vector.shape_cast %45 : vector<16x128xf32> to vector<2x8x128xf32>
      %cst_19 = arith.constant dense<0.000000e+00> : vector<8x128xf32>
      %48 = vector.multi_reduction <add>, %47, %cst_19 [0] : vector<2x8x128xf32> to vector<8x128xf32>
      %49 = arith.addf %46, %48 : vector<8x128xf32>
      %c0_20 = arith.constant 0 : index
      %c0_21 = arith.constant 0 : index
      %50 = vector.load %arg5[%c0_20, %c0_21] : memref<8x128xf32, #tpu.memory_space<vmem>>, vector<8x128xf32>
      tpu.vector_store %arg5[%c0_20, %c0_21], %49 {strides = array<i32>} : memref<8x128xf32, #tpu.memory_space<vmem>>, vector<8x128xf32>,
    } else {
    }
    %c0_i32_13 = arith.constant 0 : i32
    %32 = arith.cmpi eq, %arg1, %c0_i32_13 : i32
    %33 = arith.extui %32 : i1 to i32
    %c0_i32_14 = arith.constant 0 : i32
    %34 = arith.cmpi ne, %33, %c0_i32_14 : i32
    scf.if %34 {
      %c0_15 = arith.constant 0 : index
      %c0_16 = arith.constant 0 : index
      %35 = vector.load %arg5[%c0_15, %c0_16] : memref<8x128xf32, #tpu.memory_space<vmem>>, vector<8x128xf32>
      %36 = vector.shape_cast %35 : vector<8x128xf32> to vector<1x8x128xf32>
      %cst_17 = arith.constant dense<0.000000e+00> : vector<1xf32>
      %37 = vector.multi_reduction <add>, %36, %cst_17 [1, 2] : vector<1x8x128xf32> to vector<1xf32>
      %38 = vector.shape_cast %37 : vector<1xf32> to vector<1x1x1xf32>
      %39 = vector.extract %38[0, 0, 0] : f32 from vector<1x1x1xf32>
      %40 = vector.broadcast %39 : f32 to vector<1x1xf32>
      %c0_18 = arith.constant 0 : index
      %c0_19 = arith.constant 0 : index
      %41 = vector.load %arg4[%c0_18, %c0_19] : memref<1x1xf32, #tpu.memory_space<vmem>>, vector<1x1xf32>
      tpu.vector_store %arg4[%c0_18, %c0_19], %40 {strides = array<i32>} : memref<1x1xf32, #tpu.memory_space<vmem>>, vector<1x1xf32>,
    } else {
    }
    return
  }
  func.func @transform_0(%arg0: i32, %arg1: i32) -> (i32, i32) {
    %c1_i32 = arith.constant 1 : i32
    %0 = arith.muli %arg0, %c1_i32 : i32
    %1 = arith.addi %0, %arg1 : i32
    %c0_i32 = arith.constant 0 : i32
    %c0_i32_0 = arith.constant 0 : i32
    return %1, %c0_i32 : i32, i32
  }
  func.func @transform_1(%arg0: i32, %arg1: i32) -> (i32, i32) {
    %c1_i32 = arith.constant 1 : i32
    %0 = arith.muli %arg0, %c1_i32 : i32
    %1 = arith.addi %0, %arg1 : i32
    %c0_i32 = arith.constant 0 : i32
    %c0_i32_0 = arith.constant 0 : i32
    return %1, %c0_i32 : i32, i32
  }
  func.func @transform_2(%arg0: i32, %arg1: i32) -> (i32, i32) {
    %c0_i32 = arith.constant 0 : i32
    %c0_i32_0 = arith.constant 0 : i32
    return %arg0, %c0_i32 : i32, i32
  }
}

</mosaic_0001>

<llo_original>
// kernel: tpu_custom_call.1
$region0: #{tpu_custom_call.1}
  #allocation0 [shape = 'u32[]', space=smem, size = 0x4, offset = 0x4, fixed_abs, tag = 'smem constant byte address 0x4 - core index']
  #allocation1 [shape = 'u32[72,128]{1,0:T(1,128)}', space=vmem, size = 0x9000, scoped, tag = 'internal scratch']
  #allocation2 [shape = 'f32[8,128]{1,0:T(8,128)}', space=vmem, size = 0x1000, scoped, tag = 'scratch operand']
  %s0 = inlined_call_operand.hbm [shape: f32[16,128], index: 0, kind: input, shape index: {}]
  %s1 = inlined_call_operand.hbm [shape: f32[16,128], index: 1, kind: input, shape index: {}]
  %s2 = inlined_call_operand.hbm [shape: f32[1,1], index: 2, kind: output, shape index: {}]
  %s3 = sld [smem:[#allocation0]]
  $region42: #{tpu_custom_call.1} parent=0
    _
  %s5 = ssub.s32 1, %s3
  %s6 = scalar_select 0, %s5, %s3
  $region1: #{tpu_custom_call.1} parent=0
    #allocation3 [shape = 'u8[8192]{0}', space=vmem, size = 0x2000, scoped, tag = 'input window, operand 0, single buffered']
    #allocation4 [shape = 's32[1]{0}', space=sflag, size = 0x4, scoped, tag = 'scoped memory for tpu_custom_call.1']
    #allocation5 [shape = 's32[1]{0}', space=sflag, size = 0x4, scoped, tag = 'scoped memory for tpu_custom_call.1']
    #allocation6 [shape = 'u8[8192]{0}', space=vmem, size = 0x2000, scoped, tag = 'input window, operand 1, single buffered']
    #allocation7 [shape = 's32[1]{0}', space=sflag, size = 0x4, scoped, tag = 'scoped memory for tpu_custom_call.1']
    #allocation8 [shape = 'u8[512]{0}', space=vmem, size = 0x400, scoped, tag = 'output window, operand 0, single buffered']
    %7 = vsyncpa [#allocation4], 0
    %8 = vsyncpa [#allocation7], 0
    %9 = vsyncpa [#allocation5], 0
    // Predicated region
    $region2: #{tpu_custom_call.1} parent=1 // pred_check
      _
    $region3: #{tpu_custom_call.1} parent=1 // pred_check_branch
      %11 = sbr.rel (0) target = $region5
    $region4: #{tpu_custom_call.1} parent=1 // pred_region
      %s12 = sadd.s32 0, 0
      %s13 = smul.u32 2, %s12
      %15 = vsyncadd [#allocation4], 0
      %s16 = smul.addr %s13, 8
      %s17 = scalar_lea.hbm %s0, %s16
      %s18 = sshll.u32 %s17, 4
      %s19 = int_to_ptr.hbm [resolvable:$true] %s18
      %s20 = sshll.u32 [#allocation3], 4
      %s21 = int_to_ptr.vmem [resolvable:$true] %s20
      %26 = dma.hbm_to_vmem [thread:$0]  %s19, 256, %s21, [#allocation4], 128, 128, 8
    $region5: #{tpu_custom_call.1} parent=1 // pred_fallthru
      _
    // Predicated region
    $region6: #{tpu_custom_call.1} parent=1 // pred_check
      _
    $region7: #{tpu_custom_call.1} parent=1 // pred_check_branch
      %28 = sbr.rel (0) target = $region9
    $region8: #{tpu_custom_call.1} parent=1 // pred_region
      %s29 = sadd.s32 0, 0
      %s30 = smul.u32 2, %s29
      %32 = vsyncadd [#allocation7], 0
      %s33 = smul.addr %s30, 8
      %s34 = scalar_lea.hbm %s1, %s33
      %s35 = sshll.u32 %s34, 4
      %s36 = int_to_ptr.hbm [resolvable:$true] %s35
      %s37 = sshll.u32 [#allocation6], 4
      %s38 = int_to_ptr.vmem [resolvable:$true] %s37
      %43 = dma.hbm_to_vmem [thread:$0]  %s36, 256, %s38, [#allocation7], 128, 128, 8
    $region9: #{tpu_custom_call.1} parent=1 // pred_fallthru
      _
    // Predicated region
    $region10: #{tpu_custom_call.1} parent=1 // pred_check
      _
    $region11: #{tpu_custom_call.1} parent=1 // pred_check_branch
      %45 = sbr.rel (0) target = $region13
    $region12: #{tpu_custom_call.1} parent=1 // pred_region
      %47 = dma.done [#allocation4], 256
    $region13: #{tpu_custom_call.1} parent=1 // pred_fallthru
      _
    // Predicated region
    $region14: #{tpu_custom_call.1} parent=1 // pred_check
      _
    $region15: #{tpu_custom_call.1} parent=1 // pred_check_branch
      %49 = sbr.rel (0) target = $region17
    $region16: #{tpu_custom_call.1} parent=1 // pred_region
      %51 = dma.done [#allocation7], 256
    $region17: #{tpu_custom_call.1} parent=1 // pred_fallthru
      _
    %s52 = sadd.s32 0, 0
    %s53 = smul.u32 2, %s52
    %s54 = sadd.s32 0, 0
    %s55 = smul.u32 2, %s54
    %p56 = scmp.eq.s32.totalorder 0, 0
    // Predicated region
    $region18: #{tpu_custom_call.1} parent=1 // pred_check
      %p57 = pneg %p56
    $region19: #{tpu_custom_call.1} parent=1 // pred_check_branch
      %59 = sbr.rel (%p57) target = $region21
    $region20: #{tpu_custom_call.1} parent=1 // pred_region
      %60 = vst [vmem:[#allocation2] sm:$0xff] 0.0
    $region21: #{tpu_custom_call.1} parent=1 // pred_fallthru
      _
    %v61 = vld [vmem:[#allocation3] sm:$0xff]
    %v62 = vld [vmem:[#allocation3 + $0x8] sm:$0xff]
    %v63 = vld [vmem:[#allocation6] sm:$0xff]
    %v64 = vld [vmem:[#allocation6 + $0x8] sm:$0xff]
    %v65 = vmax.f32 %v61, 1e-07
    %v66 = vmax.f32 %v62, 1e-07
    %v67 = vmin.f32 %v65, 0.9999999
    %v68 = vmin.f32 %v66, 0.9999999
    %v69 = vmul.f32 %v63, -0.82
    %v70 = vmul.f32 %v64, -0.82
    %v71 = vlog2.pop %v67
    %v72 = vmul.f32 %v71, 0.6931472
    %v73 = vlog2.pop %v68
    %v74 = vmul.f32 %v73, 0.6931472
    %v75 = vmul.f32 %v69, %v72
    %v76 = vmul.f32 %v70, %v74
    %v77 = vsub.f32 1.0, %v63
    %v78 = vsub.f32 1.0, %v64
    %v79 = vmul.f32 %v77, -0.18
    %v80 = vmul.f32 %v78, -0.18
    %v81 = vsub.f32 1.0, %v67
    %v82 = vsub.f32 1.0, %v68
    %v83 = vlog2.pop %v81
    %v84 = vmul.f32 %v83, 0.6931472
    %v85 = vlog2.pop %v82
    %v86 = vmul.f32 %v85, 0.6931472
    %v87 = vmul.f32 %v79, %v84
    %v88 = vmul.f32 %v80, %v86
    %v89 = vadd.f32 %v75, %v87
    %v90 = vadd.f32 %v76, %v88
    %s91 = sadd.s32 0, 0
    %s92 = smul.u32 %s91, 2048
    %s93 = sadd.s32 %s92, 2048
    %p94 = scmp.gt.s32.totalorder %s93, 2048
    %p95 = scmp.le.s32.totalorder %s93, 2048
    // Predicated region
    $region22: #{tpu_custom_call.1} parent=1 // pred_check
      %p96 = pneg %p95
    $region23: #{tpu_custom_call.1} parent=1 // pred_check_branch
      %98 = sbr.rel (%p96) target = $region25
    $region24: #{tpu_custom_call.1} parent=1 // pred_region
      %v99 = vld [vmem:[#allocation2] sm:$0xff]
      %v100 = vadd.f32 %v89, %v90
      %v101 = vadd.f32 %v99, %v100
      %102 = vst [vmem:[#allocation2] sm:$0xff] %v101
    $region25: #{tpu_custom_call.1} parent=1 // pred_fallthru
      _
    // Predicated region
    $region26: #{tpu_custom_call.1} parent=1 // pred_check
      %p103 = pneg %p94
    $region27: #{tpu_custom_call.1} parent=1 // pred_check_branch
      %105 = sbr.rel (%p103) target = $region29
    $region28: #{tpu_custom_call.1} parent=1 // pred_region
      %v106 = vlaneseq
      %v107 = vshrl.u32 %v106, 7
      %v108 = vadd.s32 %v107, 8
      %v109 = vlaneseq
      %v110 = vand.u32 %v109, 127
      %v111 = vmul.u32 %v107, 128
      %v112 = vmul.u32 %v108, 128
      %v113 = vstv %s92
      %v114 = vadd.s32 %v113, %v111
      %v115 = vadd.s32 %v113, %v112
      %v116 = vadd.s32 %v114, %v110
      %v117 = vadd.s32 %v115, %v110
      %vm118 = vcmp.lt.s32.totalorder %v116, 2048
      %vm119 = vcmp.lt.s32.totalorder %v117, 2048
      %v120 = vsel %vm118, %v89, 0.0
      %v121 = vsel %vm119, %v90, 0.0
      %v122 = vld [vmem:[#allocation2] sm:$0xff]
      %v123 = vadd.f32 %v120, %v121
      %v124 = vadd.f32 %v122, %v123
      %125 = vst [vmem:[#allocation2] sm:$0xff] %v124
    $region29: #{tpu_custom_call.1} parent=1 // pred_fallthru
      _
    // Predicated region
    $region30: #{tpu_custom_call.1} parent=1 // pred_check
      %p126 = pneg %p56
    $region31: #{tpu_custom_call.1} parent=1 // pred_check_branch
      %128 = sbr.rel (%p126) target = $region33
    $region32: #{tpu_custom_call.1} parent=1 // pred_region
      %v129 = vld [vmem:[#allocation2] sm:$0xff]
      %130 = vadd.xlane.f32.xlu0 %v129
      %v131 = vpop.xlane.xlu0 %130
      %v132 = vrot.slane %v131, 4
      %v133 = vadd.f32 %v131, %v132
      %v134 = vrot.slane %v133, 2
      %v135 = vadd.f32 %v133, %v134
      %v136 = vrot.slane %v135, 1
      %v137 = vadd.f32 %v135, %v136
      %s138 = vtos %v137
      %v139 = vstv %s138
      %vm140 = vcmask 0
      %141 = vst.msk [vmem:[#allocation8] sm:$0x1] %vm140, %v139
    $region33: #{tpu_custom_call.1} parent=1 // pred_fallthru
      _
    // Predicated region
    $region34: #{tpu_custom_call.1} parent=1 // pred_check
      _
    $region35: #{tpu_custom_call.1} parent=1 // pred_check_branch
      %143 = sbr.rel (0) target = $region37
    $region36: #{tpu_custom_call.1} parent=1 // pred_region
      %145 = vsyncadd [#allocation5], 0
      %s147 = sshll.u32 [#allocation8], 4
      %s148 = int_to_ptr.vmem [resolvable:$true] %s147
      %s149 = sshll.u32 %s2, 4
      %s150 = int_to_ptr.hbm [resolvable:$true] %s149
      %152 = dma.vmem_to_hbm [thread:$0]  %s148, 16, %s150, [#allocation5]
    $region37: #{tpu_custom_call.1} parent=1 // pred_fallthru
      _
    // Predicated region
    $region38: #{tpu_custom_call.1} parent=1 // pred_check
      _
    $region39: #{tpu_custom_call.1} parent=1 // pred_check_branch
      %154 = sbr.rel (0) target = $region41
    $region40: #{tpu_custom_call.1} parent=1 // pred_region
      %156 = dma.done [#allocation5], 16
    $region41: #{tpu_custom_call.1} parent=1 // pred_fallthru
      _
    %157 = vsyncpa [#allocation4], 1
    %158 = vsyncpa [#allocation7], 1
    %159 = vsyncpa [#allocation5], 1

</llo_original>
